<compile_context>
chip_gen: v7x
topology: tpu7x:2x2x1
jax: 0.10.0
libtpu: 0.0.40
codegen_flags: <defaults>
</compile_context>

<pallas_src>
import functools

import jax
import jax.numpy as jnp
from jax.experimental import pallas as pl

# ----------------------------- model config ---------------------------------
S_DIM = 4
X_DIM = 12
HIDDENS = [S_DIM + X_DIM, 32, 32, 1]   # hiddens passed to Classifier.__init__
DROPOUT_P = 0.5
NUM_SAMPLES = 10
BATCH = 8
LANES = 128


def _mc_mlp_kernel(sx_ref, m1_ref, m2_ref,
                   w1_ref, b1_ref, w2_ref, b2_ref, w3_ref, b3_ref,
                   avg_ref, o_ref):
    """One pass over all MC samples stacked along the row (sublane) axis."""
    x = sx_ref[...]                                              # (NS*B, 16)

    # Linear -> ReLU -> Dropout (mask already scaled by 1/(1-p))
    h = jnp.dot(x, w1_ref[...], preferred_element_type=jnp.float32) + b1_ref[...]
    h = jnp.maximum(h, 0.0) * m1_ref[...]                        # (NS*B, 32)

    # Linear -> ReLU -> Dropout
    h = jnp.dot(h, w2_ref[...], preferred_element_type=jnp.float32) + b2_ref[...]
    h = jnp.maximum(h, 0.0) * m2_ref[...]                        # (NS*B, 32)

    # Linear(32,1) with the weight column replicated to 128 lanes -> ReLU -> Sigmoid
    z = jnp.dot(h, w3_ref[...], preferred_element_type=jnp.float32) + b3_ref[...]
    z = jnp.maximum(z, 0.0)                                      # (NS*B, 128)
    prob = 1.0 / (1.0 + jnp.exp(-z))                             # z >= 0: no overflow

    # Mean over MC samples: (B, NS*B) @ (NS*B, 128) -> (B, 128), lane-dense store.
    o_ref[...] = jnp.dot(avg_ref[...], prob, preferred_element_type=jnp.float32)


@functools.partial(jax.jit, static_argnames=("num_samples",))
def classifier_forward(s_mb, x_mb, params, seed, num_samples=NUM_SAMPLES):
    """Equivalent of Classifier.forward(s_mb, x_mb, num_samples)."""
    (w1, b1), (w2, b2), (w3, b3) = params
    batch = s_mb.shape[0]
    h1 = w1.shape[1]
    h2 = w2.shape[1]
    rows = num_samples * batch

    # ---- glue done in plain JAX outside the kernel --------------------------
    sx = jnp.concatenate([s_mb, x_mb], axis=1).astype(jnp.float32)  # (B, 16)
    sx_rows = jnp.tile(sx, (num_samples, 1))                        # (NS*B, 16), sample-major

    keep = 1.0 - DROPOUT_P
    key = jax.random.PRNGKey(seed)
    k1, k2 = jax.random.split(key)
    m1 = jax.random.bernoulli(k1, keep, (rows, h1)).astype(jnp.float32) / keep
    m2 = jax.random.bernoulli(k2, keep, (rows, h2)).astype(jnp.float32) / keep

    # Lane-dense variants of the 1-wide output layer and the sample-mean matrix.
    w3_rep = jnp.tile(w3, (1, LANES))                               # (32, 128)
    b3_rep = jnp.tile(b3, (1, LANES))                               # (1, 128)
    # Rows are stacked sample-major (row = s*B + b), so mean over samples is
    # [I_B, I_B, ..., I_B] / NS applied on the left.
    avg = jnp.tile(jnp.eye(batch, dtype=jnp.float32), (1, num_samples)) / num_samples

    out = pl.pallas_call(
        _mc_mlp_kernel,
        out_shape=jax.ShapeDtypeStruct((batch, LANES), jnp.float32),
    )(sx_rows, m1, m2, w1, b1, w2, b2, w3_rep, b3_rep, avg)

    return out[:, :1]                                               # (B, 1)


def init_params(key, hiddens):
    """Deterministic Linear params; weights stored as (in, out), biases as (1, out)."""
    params = []
    for in_dim, out_dim in zip(hiddens[:-1], hiddens[1:]):
        key, kw, kb = jax.random.split(key, 3)
        bound = 1.0 / jnp.sqrt(in_dim)  # PyTorch Linear default init range
        w = jax.random.uniform(kw, (in_dim, out_dim), jnp.float32, -bound, bound)
        b = jax.random.uniform(kb, (1, out_dim), jnp.float32, -bound, bound)
        params.append((w, b))
    return params


if __name__ == "__main__":
    key = jax.random.PRNGKey(0)
    k_s, k_x, k_p = jax.random.split(key, 3)

    s_mb = jax.random.normal(k_s, (BATCH, S_DIM), jnp.float32)
    x_mb = jax.random.normal(k_x, (BATCH, X_DIM), jnp.float32)
    params = init_params(k_p, HIDDENS)

    probs = classifier_forward(s_mb, x_mb, params, seed=0)
    jax.block_until_ready(probs)

    assert probs.shape == (BATCH, 1)
    # ReLU before Sigmoid => per-sample outputs in [0.5, 1), so the mean is too.
    assert bool(jnp.all(probs >= 0.5)) and bool(jnp.all(probs <= 1.0))
    print("KERNEL_OK")
</pallas_src>

<mosaic_0001>
module attributes {stable_mosaic.version = 11 : i64} {
  func.func @_mc_mlp_kernel(%arg0: memref<80x16xf32, #tpu.memory_space<vmem>>, %arg1: memref<80x32xf32, #tpu.memory_space<vmem>>, %arg2: memref<80x32xf32, #tpu.memory_space<vmem>>, %arg3: memref<16x32xf32, #tpu.memory_space<vmem>>, %arg4: memref<1x32xf32, #tpu.memory_space<vmem>>, %arg5: memref<32x32xf32, #tpu.memory_space<vmem>>, %arg6: memref<1x32xf32, #tpu.memory_space<vmem>>, %arg7: memref<32x128xf32, #tpu.memory_space<vmem>>, %arg8: memref<1x128xf32, #tpu.memory_space<vmem>>, %arg9: memref<8x80xf32, #tpu.memory_space<vmem>>, %arg10: memref<8x128xf32, #tpu.memory_space<vmem>>) attributes {dimension_semantics = [], scalar_prefetch = 0 : i64, scratch_operands = 0 : i64, tpu.core_type = #tpu.core_type<tc>} {
    %c0 = arith.constant 0 : index
    %c0_0 = arith.constant 0 : index
    %0 = vector.load %arg0[%c0, %c0_0] : memref<80x16xf32, #tpu.memory_space<vmem>>, vector<80x16xf32>
    %c0_1 = arith.constant 0 : index
    %c0_2 = arith.constant 0 : index
    %1 = vector.load %arg3[%c0_1, %c0_2] : memref<16x32xf32, #tpu.memory_space<vmem>>, vector<16x32xf32>
    %cst = arith.constant dense<0.000000e+00> : vector<80x32xf32>
    %2 = tpu.matmul %0, %1, %cst {dimension_numbers = #tpu.dot_dimension_numbers<[1], [0], [0], [1], [0, 0, 1, 1], [], []>} : vector<80x16xf32>, vector<16x32xf32>, vector<80x32xf32> -> vector<80x32xf32>
    %c0_3 = arith.constant 0 : index
    %c0_4 = arith.constant 0 : index
    %3 = vector.load %arg4[%c0_3, %c0_4] : memref<1x32xf32, #tpu.memory_space<vmem>>, vector<1x32xf32>
    %4 = vector.broadcast %3 : vector<1x32xf32> to vector<80x32xf32>
    %5 = arith.addf %2, %4 : vector<80x32xf32>
    %cst_5 = arith.constant 0.000000e+00 : f32
    %6 = vector.broadcast %cst_5 : f32 to vector<80x32xf32>
    %7 = arith.maximumf %5, %6 : vector<80x32xf32>
    %c0_6 = arith.constant 0 : index
    %c0_7 = arith.constant 0 : index
    %8 = vector.load %arg1[%c0_6, %c0_7] : memref<80x32xf32, #tpu.memory_space<vmem>>, vector<80x32xf32>
    %9 = arith.mulf %7, %8 : vector<80x32xf32>
    %c0_8 = arith.constant 0 : index
    %c0_9 = arith.constant 0 : index
    %10 = vector.load %arg5[%c0_8, %c0_9] : memref<32x32xf32, #tpu.memory_space<vmem>>, vector<32x32xf32>
    %cst_10 = arith.constant dense<0.000000e+00> : vector<80x32xf32>
    %11 = tpu.matmul %9, %10, %cst_10 {dimension_numbers = #tpu.dot_dimension_numbers<[1], [0], [0], [1], [0, 0, 1, 1], [], []>} : vector<80x32xf32>, vector<32x32xf32>, vector<80x32xf32> -> vector<80x32xf32>
    %c0_11 = arith.constant 0 : index
    %c0_12 = arith.constant 0 : index
    %12 = vector.load %arg6[%c0_11, %c0_12] : memref<1x32xf32, #tpu.memory_space<vmem>>, vector<1x32xf32>
    %13 = vector.broadcast %12 : vector<1x32xf32> to vector<80x32xf32>
    %14 = arith.addf %11, %13 : vector<80x32xf32>
    %cst_13 = arith.constant 0.000000e+00 : f32
    %15 = vector.broadcast %cst_13 : f32 to vector<80x32xf32>
    %16 = arith.maximumf %14, %15 : vector<80x32xf32>
    %c0_14 = arith.constant 0 : index
    %c0_15 = arith.constant 0 : index
    %17 = vector.load %arg2[%c0_14, %c0_15] : memref<80x32xf32, #tpu.memory_space<vmem>>, vector<80x32xf32>
    %18 = arith.mulf %16, %17 : vector<80x32xf32>
    %c0_16 = arith.constant 0 : index
    %c0_17 = arith.constant 0 : index
    %19 = vector.load %arg7[%c0_16, %c0_17] : memref<32x128xf32, #tpu.memory_space<vmem>>, vector<32x128xf32>
    %cst_18 = arith.constant dense<0.000000e+00> : vector<80x128xf32>
    %20 = tpu.matmul %18, %19, %cst_18 {dimension_numbers = #tpu.dot_dimension_numbers<[1], [0], [0], [1], [0, 0, 1, 1], [], []>} : vector<80x32xf32>, vector<32x128xf32>, vector<80x128xf32> -> vector<80x128xf32>
    %c0_19 = arith.constant 0 : index
    %c0_20 = arith.constant 0 : index
    %21 = vector.load %arg8[%c0_19, %c0_20] : memref<1x128xf32, #tpu.memory_space<vmem>>, vector<1x128xf32>
    %22 = vector.broadcast %21 : vector<1x128xf32> to vector<80x128xf32>
    %23 = arith.addf %20, %22 : vector<80x128xf32>
    %cst_21 = arith.constant 0.000000e+00 : f32
    %24 = vector.broadcast %cst_21 : f32 to vector<80x128xf32>
    %25 = arith.maximumf %23, %24 : vector<80x128xf32>
    %cst_22 = arith.constant 0.000000e+00 : f32
    %26 = vector.broadcast %cst_22 : f32 to vector<80x128xf32>
    %27 = arith.subf %26, %25 : vector<80x128xf32>
    %28 = math.exp %27 : vector<80x128xf32>
    %cst_23 = arith.constant 1.000000e+00 : f32
    %29 = vector.broadcast %cst_23 : f32 to vector<80x128xf32>
    %30 = arith.addf %29, %28 : vector<80x128xf32>
    %cst_24 = arith.constant 1.000000e+00 : f32
    %31 = vector.broadcast %cst_24 : f32 to vector<80x128xf32>
    %32 = arith.divf %31, %30 : vector<80x128xf32>
    %c0_25 = arith.constant 0 : index
    %c0_26 = arith.constant 0 : index
    %33 = vector.load %arg9[%c0_25, %c0_26] : memref<8x80xf32, #tpu.memory_space<vmem>>, vector<8x80xf32>
    %cst_27 = arith.constant dense<0.000000e+00> : vector<8x128xf32>
    %34 = tpu.matmul %33, %32, %cst_27 {dimension_numbers = #tpu.dot_dimension_numbers<[1], [0], [0], [1], [0, 0, 1, 1], [], []>} : vector<8x80xf32>, vector<80x128xf32>, vector<8x128xf32> -> vector<8x128xf32>
    %c0_28 = arith.constant 0 : index
    %c0_29 = arith.constant 0 : index
    %35 = vector.load %arg10[%c0_28, %c0_29] : memref<8x128xf32, #tpu.memory_space<vmem>>, vector<8x128xf32>
    tpu.vector_store %arg10[%c0_28, %c0_29], %34 {strides = array<i32>} : memref<8x128xf32, #tpu.memory_space<vmem>>, vector<8x128xf32>,
    return
  }
}

</mosaic_0001>

<llo_original>
// kernel: classifier_forward.3
$region0: #{classifier_forward.3}
  #allocation0 [shape = 'u32[]', space=smem, size = 0x4, offset = 0x4, fixed_abs, tag = 'smem constant byte address 0x4 - core index']
  #allocation1 [shape = 'u32[144,128]{1,0:T(1,128)}', space=vmem, size = 0x12000, scoped, tag = 'internal scratch']
  %s0 = inlined_call_operand.vmem [shape: f32[80,16], index: 0, kind: input, shape index: {}]
  %s1 = inlined_call_operand.vmem [shape: f32[80,32], index: 1, kind: input, shape index: {}]
  %s2 = inlined_call_operand.vmem [shape: f32[80,32], index: 2, kind: input, shape index: {}]
  %s3 = inlined_call_operand.vmem [shape: f32[16,32], index: 3, kind: input, shape index: {}]
  %s4 = inlined_call_operand.vmem [shape: f32[1,32], index: 4, kind: input, shape index: {}]
  %s5 = inlined_call_operand.vmem [shape: f32[32,32], index: 5, kind: input, shape index: {}]
  %s6 = inlined_call_operand.vmem [shape: f32[1,32], index: 6, kind: input, shape index: {}]
  %s7 = inlined_call_operand.vmem [shape: f32[32,128], index: 7, kind: input, shape index: {}]
  %s8 = inlined_call_operand.vmem [shape: f32[1,128], index: 8, kind: input, shape index: {}]
  %s9 = inlined_call_operand.vmem [shape: f32[8,80], index: 9, kind: input, shape index: {}]
  %s10 = inlined_call_operand.vmem [shape: f32[8,128], index: 10, kind: output, shape index: {}]
  %s11 = sld [smem:[#allocation0]]
  $region50: #{classifier_forward.3} parent=0
    _
  %s13 = ssub.s32 1, %s11
  %s14 = scalar_select 0, %s13, %s11
  // Predicated region
  $region2: #{classifier_forward.3} parent=0 // pred_check
    _
  $region3: #{classifier_forward.3} parent=0 // pred_check_branch
    %16 = sbr.rel (0) target = $region5
  $region4: #{classifier_forward.3} parent=0 // pred_region
    _
  $region5: #{classifier_forward.3} parent=0 // pred_fallthru
    _
  // Predicated region
  $region6: #{classifier_forward.3} parent=0 // pred_check
    _
  $region7: #{classifier_forward.3} parent=0 // pred_check_branch
    %18 = sbr.rel (0) target = $region9
  $region8: #{classifier_forward.3} parent=0 // pred_region
    _
  $region9: #{classifier_forward.3} parent=0 // pred_fallthru
    _
  // Predicated region
  $region10: #{classifier_forward.3} parent=0 // pred_check
    _
  $region11: #{classifier_forward.3} parent=0 // pred_check_branch
    %20 = sbr.rel (0) target = $region13
  $region12: #{classifier_forward.3} parent=0 // pred_region
    _
  $region13: #{classifier_forward.3} parent=0 // pred_fallthru
    _
  // Predicated region
  $region14: #{classifier_forward.3} parent=0 // pred_check
    _
  $region15: #{classifier_forward.3} parent=0 // pred_check_branch
    %22 = sbr.rel (0) target = $region17
  $region16: #{classifier_forward.3} parent=0 // pred_region
    _
  $region17: #{classifier_forward.3} parent=0 // pred_fallthru
    _
  // Predicated region
  $region18: #{classifier_forward.3} parent=0 // pred_check
    _
  $region19: #{classifier_forward.3} parent=0 // pred_check_branch
    %24 = sbr.rel (0) target = $region21
  $region20: #{classifier_forward.3} parent=0 // pred_region
    _
  $region21: #{classifier_forward.3} parent=0 // pred_fallthru
    _
  // Predicated region
  $region22: #{classifier_forward.3} parent=0 // pred_check
    _
  $region23: #{classifier_forward.3} parent=0 // pred_check_branch
    %26 = sbr.rel (0) target = $region25
  $region24: #{classifier_forward.3} parent=0 // pred_region
    _
  $region25: #{classifier_forward.3} parent=0 // pred_fallthru
    _
  // Predicated region
  $region26: #{classifier_forward.3} parent=0 // pred_check
    _
  $region27: #{classifier_forward.3} parent=0 // pred_check_branch
    %28 = sbr.rel (0) target = $region29
  $region28: #{classifier_forward.3} parent=0 // pred_region
    _
  $region29: #{classifier_forward.3} parent=0 // pred_fallthru
    _
  // Predicated region
  $region30: #{classifier_forward.3} parent=0 // pred_check
    _
  $region31: #{classifier_forward.3} parent=0 // pred_check_branch
    %30 = sbr.rel (0) target = $region33
  $region32: #{classifier_forward.3} parent=0 // pred_region
    _
  $region33: #{classifier_forward.3} parent=0 // pred_fallthru
    _
  // Predicated region
  $region34: #{classifier_forward.3} parent=0 // pred_check
    _
  $region35: #{classifier_forward.3} parent=0 // pred_check_branch
    %32 = sbr.rel (0) target = $region37
  $region36: #{classifier_forward.3} parent=0 // pred_region
    _
  $region37: #{classifier_forward.3} parent=0 // pred_fallthru
    _
  // Predicated region
  $region38: #{classifier_forward.3} parent=0 // pred_check
    _
  $region39: #{classifier_forward.3} parent=0 // pred_check_branch
    %34 = sbr.rel (0) target = $region41
  $region40: #{classifier_forward.3} parent=0 // pred_region
    _
  $region41: #{classifier_forward.3} parent=0 // pred_fallthru
    _
  %v35 = vld [vmem:[%s0] sm:$0xff]
  %v36 = vld [vmem:[%s0 + $0x8] sm:$0xff]
  %v37 = vld [vmem:[%s0 + $0x10] sm:$0xff]
  %v38 = vld [vmem:[%s0 + $0x18] sm:$0xff]
  %v39 = vld [vmem:[%s0 + $0x20] sm:$0xff]
  %v40 = vld [vmem:[%s0 + $0x28] sm:$0xff]
  %v41 = vld [vmem:[%s0 + $0x30] sm:$0xff]
  %v42 = vld [vmem:[%s0 + $0x38] sm:$0xff]
  %v43 = vld [vmem:[%s0 + $0x40] sm:$0xff]
  %v44 = vld [vmem:[%s0 + $0x48] sm:$0xff]
  %v45 = vld [vmem:[%s3] sm:$0xff]
  %v46 = vld [vmem:[%s3 + $0x8] sm:$0xff]
  %v47 = vld [vmem:[%s4] sm:$0x1]
  %v49 = vlaneseq
  %v50 = vshrl.u32 %v49, 7
  %v51 = vsub.s32 0, %v50
  %v52 = vrot.slane %v47, %v51
  %vm54 = vcmask 130048
  %v56 = vsel %vm54, %v35, 0
  %v59 = vsel %vm54, %v36, 0
  %v62 = vsel %vm54, %v37, 0
  %v65 = vsel %vm54, %v38, 0
  %v68 = vsel %vm54, %v39, 0
  %v71 = vsel %vm54, %v40, 0
  %v74 = vsel %vm54, %v41, 0
  %v77 = vsel %vm54, %v42, 0
  %v80 = vsel %vm54, %v43, 0
  %v83 = vsel %vm54, %v44, 0
  %85 = vmatprep.subr.mxu0 0.0
  %86 = vmatpush1.msra.mxu0 %v45
  %87 = vmatprep.subr.mxu0 0.0
  %88 = vmatpush1.msra.mxu0 %v46
  %89 = vmatprep.subr.mxu0 0.0
  %90 = vmatpush1.msra.mxu0 0.0
  %91 = vmatprep.subr.mxu0 0.0
  %92 = vmatpush1.msra.mxu0 0.0
  %93 = vmatprep.subr.mxu0 0.0
  %94 = vmatpush1.msra.mxu0 0.0
  %95 = vmatprep.subr.mxu0 0.0
  %96 = vmatpush1.msra.mxu0 0.0
  %97 = vmatprep.subr.mxu0 0.0
  %98 = vmatpush1.msra.mxu0 0.0
  %99 = vmatprep.subr.mxu0 0.0
  %100 = vmatpush1.msra.mxu0 0.0
  %101 = vmatprep.subr.mxu0 0.0
  %102 = vmatpush1.msra.mxu0 0.0
  %103 = vmatprep.subr.mxu0 0.0
  %104 = vmatpush1.msra.mxu0 0.0
  %105 = vmatprep.subr.mxu0 0.0
  %106 = vmatpush1.msra.mxu0 0.0
  %107 = vmatprep.subr.mxu0 0.0
  %108 = vmatpush1.msra.mxu0 0.0
  %109 = vmatprep.subr.mxu0 0.0
  %110 = vmatpush1.msra.mxu0 0.0
  %111 = vmatprep.subr.mxu0 0.0
  %112 = vmatpush1.msra.mxu0 0.0
  %113 = vmatprep.subr.mxu0 0.0
  %114 = vmatpush1.msra.mxu0 0.0
  %115 = vmatprep.subr.mxu0 0.0
  %116 = vmatpush1.msra.mxu0 0.0
  %117 = vmatprep.subr.mxu0 0.0
  %118 = vmatpush1.msra.mxu0 0.0
  %119 = vmatprep.subr.mxu0 0.0
  %120 = vmatpush1.msra.mxu0 0.0
  %121 = vmatprep.subr.mxu0 0.0
  %122 = vmatpush1.msra.mxu0 0.0
  %123 = vmatprep.subr.mxu0 0.0
  %124 = vmatpush1.msra.mxu0 0.0
  %125 = vmatprep.subr.mxu0 0.0
  %126 = vmatpush1.msra.mxu0 0.0
  %127 = vmatprep.subr.mxu0 0.0
  %128 = vmatpush1.msra.mxu0 0.0
  %129 = vmatprep.subr.mxu0 0.0
  %130 = vmatpush1.msra.mxu0 0.0
  %131 = vmatprep.subr.mxu0 0.0
  %132 = vmatpush1.msra.mxu0 0.0
  %133 = vmatprep.subr.mxu0 0.0
  %134 = vmatpush1.msra.mxu0 0.0
  %135 = vmatprep.subr.mxu0 0.0
  %136 = vmatpush1.msra.mxu0 0.0
  %137 = vmatprep.subr.mxu0 0.0
  %138 = vmatpush1.msra.mxu0 0.0
  %139 = vmatprep.subr.mxu0 0.0
  %140 = vmatpush1.msra.mxu0 0.0
  %141 = vmatprep.subr.mxu0 0.0
  %142 = vmatpush1.msra.mxu0 0.0
  %143 = vmatprep.subr.mxu0 0.0
  %144 = vmatpush1.msra.mxu0 0.0
  %145 = vmatprep.subr.mxu0 0.0
  %146 = vmatpush1.msra.mxu0 0.0
  %147 = vmatprep.subr.mxu0 0.0
  %148 = vmatpush1.msra.mxu0 0.0
  %149 = vmatprep.mubr.f32.mxu0 0.0
  %150 = vmatmul.mubr.f32.gmra.mrb[0].mxu0 %v56
  %v151 = vpop.f32.mrb[0].mxu0
  %v152 = vadd.f32 %v52, %v151
  %v153 = vpop.f32.mrb[0].mxu0
  %154 = vmatprep.mubr.f32.mxu0 0.0
  %155 = vmatmul.mubr.f32.gmra.mrb[0].mxu0 %v59
  %v156 = vpop.f32.mrb[0].mxu0
  %v157 = vadd.f32 %v52, %v156
  %v158 = vpop.f32.mrb[0].mxu0
  %159 = vmatprep.mubr.f32.mxu0 0.0
  %160 = vmatmul.mubr.f32.gmra.mrb[0].mxu0 %v62
  %v161 = vpop.f32.mrb[0].mxu0
  %v162 = vadd.f32 %v52, %v161
  %v163 = vpop.f32.mrb[0].mxu0
  %164 = vmatprep.mubr.f32.mxu0 0.0
  %165 = vmatmul.mubr.f32.gmra.mrb[0].mxu0 %v65
  %v166 = vpop.f32.mrb[0].mxu0
  %v167 = vadd.f32 %v52, %v166
  %v168 = vpop.f32.mrb[0].mxu0
  %169 = vmatprep.mubr.f32.mxu0 0.0
  %170 = vmatmul.mubr.f32.gmra.mrb[0].mxu0 %v68
  %v171 = vpop.f32.mrb[0].mxu0
  %v172 = vadd.f32 %v52, %v171
  %v173 = vpop.f32.mrb[0].mxu0
  %174 = vmatprep.mubr.f32.mxu0 0.0
  %175 = vmatmul.mubr.f32.gmra.mrb[0].mxu0 %v71
  %v176 = vpop.f32.mrb[0].mxu0
  %v177 = vadd.f32 %v52, %v176
  %v178 = vpop.f32.mrb[0].mxu0
  %179 = vmatprep.mubr.f32.mxu0 0.0
  %180 = vmatmul.mubr.f32.gmra.mrb[0].mxu0 %v74
  %v181 = vpop.f32.mrb[0].mxu0
  %v182 = vadd.f32 %v52, %v181
  %v183 = vpop.f32.mrb[0].mxu0
  %184 = vmatprep.mubr.f32.mxu0 0.0
  %185 = vmatmul.mubr.f32.gmra.mrb[0].mxu0 %v77
  %v186 = vpop.f32.mrb[0].mxu0
  %v187 = vadd.f32 %v52, %v186
  %v188 = vpop.f32.mrb[0].mxu0
  %189 = vmatprep.mubr.f32.mxu0 0.0
  %190 = vmatmul.mubr.f32.gmra.mrb[0].mxu0 %v80
  %v191 = vpop.f32.mrb[0].mxu0
  %v192 = vadd.f32 %v52, %v191
  %v193 = vpop.f32.mrb[0].mxu0
  %194 = vmatprep.mubr.f32.mxu0 0.0
  %195 = vmatmul.mubr.f32.gmra.mrb[0].mxu0 %v83
  %v196 = vpop.f32.mrb[0].mxu0
  %v197 = vadd.f32 %v52, %v196
  %v198 = vpop.f32.mrb[0].mxu0
  %199 = vdwg.mxu0
  %v200 = vmax.f32 %v152, 0.0
  %v201 = vmax.f32 %v157, 0.0
  %v202 = vmax.f32 %v162, 0.0
  %v203 = vmax.f32 %v167, 0.0
  %v204 = vmax.f32 %v172, 0.0
  %v205 = vmax.f32 %v177, 0.0
  %v206 = vmax.f32 %v182, 0.0
  %v207 = vmax.f32 %v187, 0.0
  %v208 = vmax.f32 %v192, 0.0
  %v209 = vmax.f32 %v197, 0.0
  %v210 = vld [vmem:[%s1] sm:$0xff]
  %v211 = vld [vmem:[%s1 + $0x8] sm:$0xff]
  %v212 = vld [vmem:[%s1 + $0x10] sm:$0xff]
  %v213 = vld [vmem:[%s1 + $0x18] sm:$0xff]
  %v214 = vld [vmem:[%s1 + $0x20] sm:$0xff]
  %v215 = vld [vmem:[%s1 + $0x28] sm:$0xff]
  %v216 = vld [vmem:[%s1 + $0x30] sm:$0xff]
  %v217 = vld [vmem:[%s1 + $0x38] sm:$0xff]
  %v218 = vld [vmem:[%s1 + $0x40] sm:$0xff]
  %v219 = vld [vmem:[%s1 + $0x48] sm:$0xff]
  %v220 = vmul.f32 %v200, %v210
  %v221 = vmul.f32 %v201, %v211
  %v222 = vmul.f32 %v202, %v212
  %v223 = vmul.f32 %v203, %v213
  %v224 = vmul.f32 %v204, %v214
  %v225 = vmul.f32 %v205, %v215
  %v226 = vmul.f32 %v206, %v216
  %v227 = vmul.f32 %v207, %v217
  %v228 = vmul.f32 %v208, %v218
  %v229 = vmul.f32 %v209, %v219
  %v230 = vld [vmem:[%s5] sm:$0xff]
  %v231 = vld [vmem:[%s5 + $0x8] sm:$0xff]
  %v232 = vld [vmem:[%s5 + $0x10] sm:$0xff]
  %v233 = vld [vmem:[%s5 + $0x18] sm:$0xff]
  %v234 = vld [vmem:[%s6] sm:$0x1]
  %v236 = vlaneseq
  %v237 = vshrl.u32 %v236, 7
  %v238 = vsub.s32 0, %v237
  %v239 = vrot.slane %v234, %v238
  %vm241 = vcmask 261120
  %v243 = vsel %vm241, %v220, 0
  %v246 = vsel %vm241, %v221, 0
  %v249 = vsel %vm241, %v222, 0
  %v252 = vsel %vm241, %v223, 0
  %v255 = vsel %vm241, %v224, 0
  %v258 = vsel %vm241, %v225, 0
  %v261 = vsel %vm241, %v226, 0
  %v264 = vsel %vm241, %v227, 0
  %v267 = vsel %vm241, %v228, 0
  %v270 = vsel %vm241, %v229, 0
  %272 = vmatprep.subr.mxu0 0.0
  %273 = vmatpush1.msra.mxu0 %v230
  %274 = vmatprep.subr.mxu0 0.0
  %275 = vmatpush1.msra.mxu0 %v231
  %276 = vmatprep.subr.mxu0 0.0
  %277 = vmatpush1.msra.mxu0 %v232
  %278 = vmatprep.subr.mxu0 0.0
  %279 = vmatpush1.msra.mxu0 %v233
  %280 = vmatprep.subr.mxu0 0.0
  %281 = vmatpush1.msra.mxu0 0.0
  %282 = vmatprep.subr.mxu0 0.0
  %283 = vmatpush1.msra.mxu0 0.0
  %284 = vmatprep.subr.mxu0 0.0
  %285 = vmatpush1.msra.mxu0 0.0
  %286 = vmatprep.subr.mxu0 0.0
  %287 = vmatpush1.msra.mxu0 0.0
  %288 = vmatprep.subr.mxu0 0.0
  %289 = vmatpush1.msra.mxu0 0.0
  %290 = vmatprep.subr.mxu0 0.0
  %291 = vmatpush1.msra.mxu0 0.0
  %292 = vmatprep.subr.mxu0 0.0
  %293 = vmatpush1.msra.mxu0 0.0
  %294 = vmatprep.subr.mxu0 0.0
  %295 = vmatpush1.msra.mxu0 0.0
  %296 = vmatprep.subr.mxu0 0.0
  %297 = vmatpush1.msra.mxu0 0.0
  %298 = vmatprep.subr.mxu0 0.0
  %299 = vmatpush1.msra.mxu0 0.0
  %300 = vmatprep.subr.mxu0 0.0
  %301 = vmatpush1.msra.mxu0 0.0
  %302 = vmatprep.subr.mxu0 0.0
  %303 = vmatpush1.msra.mxu0 0.0
  %304 = vmatprep.subr.mxu0 0.0
  %305 = vmatpush1.msra.mxu0 0.0
  %306 = vmatprep.subr.mxu0 0.0
  %307 = vmatpush1.msra.mxu0 0.0
  %308 = vmatprep.subr.mxu0 0.0
  %309 = vmatpush1.msra.mxu0 0.0
  %310 = vmatprep.subr.mxu0 0.0
  %311 = vmatpush1.msra.mxu0 0.0
  %312 = vmatprep.subr.mxu0 0.0
  %313 = vmatpush1.msra.mxu0 0.0
  %314 = vmatprep.subr.mxu0 0.0
  %315 = vmatpush1.msra.mxu0 0.0
  %316 = vmatprep.subr.mxu0 0.0
  %317 = vmatpush1.msra.mxu0 0.0
  %318 = vmatprep.subr.mxu0 0.0
  %319 = vmatpush1.msra.mxu0 0.0
  %320 = vmatprep.subr.mxu0 0.0
  %321 = vmatpush1.msra.mxu0 0.0
  %322 = vmatprep.subr.mxu0 0.0
  %323 = vmatpush1.msra.mxu0 0.0
  %324 = vmatprep.subr.mxu0 0.0
  %325 = vmatpush1.msra.mxu0 0.0
  %326 = vmatprep.subr.mxu0 0.0
  %327 = vmatpush1.msra.mxu0 0.0
  %328 = vmatprep.subr.mxu0 0.0
  %329 = vmatpush1.msra.mxu0 0.0
  %330 = vmatprep.subr.mxu0 0.0
  %331 = vmatpush1.msra.mxu0 0.0
  %332 = vmatprep.subr.mxu0 0.0
  %333 = vmatpush1.msra.mxu0 0.0
  %334 = vmatprep.subr.mxu0 0.0
  %335 = vmatpush1.msra.mxu0 0.0
  %336 = vmatprep.mubr.f32.mxu0 0.0
  %337 = vmatmul.mubr.f32.gmra.mrb[0].mxu0 %v243
  %v338 = vpop.f32.mrb[0].mxu0
  %v339 = vadd.f32 %v239, %v338
  %v340 = vpop.f32.mrb[0].mxu0
  %341 = vmatprep.mubr.f32.mxu0 0.0
  %342 = vmatmul.mubr.f32.gmra.mrb[0].mxu0 %v246
  %v343 = vpop.f32.mrb[0].mxu0
  %v344 = vadd.f32 %v239, %v343
  %v345 = vpop.f32.mrb[0].mxu0
  %346 = vmatprep.mubr.f32.mxu0 0.0
  %347 = vmatmul.mubr.f32.gmra.mrb[0].mxu0 %v249
  %v348 = vpop.f32.mrb[0].mxu0
  %v349 = vadd.f32 %v239, %v348
  %v350 = vpop.f32.mrb[0].mxu0
  %351 = vmatprep.mubr.f32.mxu0 0.0
  %352 = vmatmul.mubr.f32.gmra.mrb[0].mxu0 %v252
  %v353 = vpop.f32.mrb[0].mxu0
  %v354 = vadd.f32 %v239, %v353
  %v355 = vpop.f32.mrb[0].mxu0
  %356 = vmatprep.mubr.f32.mxu0 0.0
  %357 = vmatmul.mubr.f32.gmra.mrb[0].mxu0 %v255
  %v358 = vpop.f32.mrb[0].mxu0
  %v359 = vadd.f32 %v239, %v358
  %v360 = vpop.f32.mrb[0].mxu0
  %361 = vmatprep.mubr.f32.mxu0 0.0
  %362 = vmatmul.mubr.f32.gmra.mrb[0].mxu0 %v258
  %v363 = vpop.f32.mrb[0].mxu0
  %v364 = vadd.f32 %v239, %v363
  %v365 = vpop.f32.mrb[0].mxu0
  %366 = vmatprep.mubr.f32.mxu0 0.0
  %367 = vmatmul.mubr.f32.gmra.mrb[0].mxu0 %v261
  %v368 = vpop.f32.mrb[0].mxu0
  %v369 = vadd.f32 %v239, %v368
  %v370 = vpop.f32.mrb[0].mxu0
  %371 = vmatprep.mubr.f32.mxu0 0.0
  %372 = vmatmul.mubr.f32.gmra.mrb[0].mxu0 %v264
  %v373 = vpop.f32.mrb[0].mxu0
  %v374 = vadd.f32 %v239, %v373
  %v375 = vpop.f32.mrb[0].mxu0
  %376 = vmatprep.mubr.f32.mxu0 0.0
  %377 = vmatmul.mubr.f32.gmra.mrb[0].mxu0 %v267
  %v378 = vpop.f32.mrb[0].mxu0
  %v379 = vadd.f32 %v239, %v378
  %v380 = vpop.f32.mrb[0].mxu0
  %381 = vmatprep.mubr.f32.mxu0 0.0
  %382 = vmatmul.mubr.f32.gmra.mrb[0].mxu0 %v270
  %v383 = vpop.f32.mrb[0].mxu0
  %v384 = vadd.f32 %v239, %v383
  %v385 = vpop.f32.mrb[0].mxu0
  %386 = vdwg.mxu0
  %v387 = vmax.f32 %v339, 0.0
  %v388 = vmax.f32 %v344, 0.0
  %v389 = vmax.f32 %v349, 0.0
  %v390 = vmax.f32 %v354, 0.0
  %v391 = vmax.f32 %v359, 0.0
  %v392 = vmax.f32 %v364, 0.0
  %v393 = vmax.f32 %v369, 0.0
  %v394 = vmax.f32 %v374, 0.0
  %v395 = vmax.f32 %v379, 0.0
  %v396 = vmax.f32 %v384, 0.0
  %v397 = vld [vmem:[%s2] sm:$0xff]
  %v398 = vld [vmem:[%s2 + $0x8] sm:$0xff]
  %v399 = vld [vmem:[%s2 + $0x10] sm:$0xff]
  %v400 = vld [vmem:[%s2 + $0x18] sm:$0xff]
  %v401 = vld [vmem:[%s2 + $0x20] sm:$0xff]
  %v402 = vld [vmem:[%s2 + $0x28] sm:$0xff]
  %v403 = vld [vmem:[%s2 + $0x30] sm:$0xff]
  %v404 = vld [vmem:[%s2 + $0x38] sm:$0xff]
  %v405 = vld [vmem:[%s2 + $0x40] sm:$0xff]
  %v406 = vld [vmem:[%s2 + $0x48] sm:$0xff]
  %v407 = vmul.f32 %v387, %v397
  %v408 = vmul.f32 %v388, %v398
  %v409 = vmul.f32 %v389, %v399
  %v410 = vmul.f32 %v390, %v400
  %v411 = vmul.f32 %v391, %v401
  %v412 = vmul.f32 %v392, %v402
  %v413 = vmul.f32 %v393, %v403
  %v414 = vmul.f32 %v394, %v404
  %v415 = vmul.f32 %v395, %v405
  %v416 = vmul.f32 %v396, %v406
  %v417 = vld [vmem:[%s7] sm:$0xff]
  %v418 = vld [vmem:[%s7 + $0x8] sm:$0xff]
  %v419 = vld [vmem:[%s7 + $0x10] sm:$0xff]
  %v420 = vld [vmem:[%s7 + $0x18] sm:$0xff]
  %v421 = vld [vmem:[%s8] sm:$0x1]
  %v423 = vlaneseq
  %v424 = vshrl.u32 %v423, 7
  %v425 = vsub.s32 0, %v424
  %v426 = vrot.slane %v421, %v425
  %v429 = vsel %vm241, %v407, 0
  %v432 = vsel %vm241, %v408, 0
  %v435 = vsel %vm241, %v409, 0
  %v438 = vsel %vm241, %v410, 0
  %v441 = vsel %vm241, %v411, 0
  %v444 = vsel %vm241, %v412, 0
  %v447 = vsel %vm241, %v413, 0
  %v450 = vsel %vm241, %v414, 0
  %v453 = vsel %vm241, %v415, 0
  %v456 = vsel %vm241, %v416, 0
  %458 = vmatprep.subr.mxu0 0.0
  %459 = vmatpush1.msra.mxu0 %v417
  %460 = vmatprep.subr.mxu0 0.0
  %461 = vmatpush1.msra.mxu0 %v418
  %462 = vmatprep.subr.mxu0 0.0
  %463 = vmatpush1.msra.mxu0 %v419
  %464 = vmatprep.subr.mxu0 0.0
  %465 = vmatpush1.msra.mxu0 %v420
  %466 = vmatprep.subr.mxu0 0.0
  %467 = vmatpush1.msra.mxu0 0.0
  %468 = vmatprep.subr.mxu0 0.0
  %469 = vmatpush1.msra.mxu0 0.0
  %470 = vmatprep.subr.mxu0 0.0
  %471 = vmatpush1.msra.mxu0 0.0
  %472 = vmatprep.subr.mxu0 0.0
  %473 = vmatpush1.msra.mxu0 0.0
  %474 = vmatprep.subr.mxu0 0.0
  %475 = vmatpush1.msra.mxu0 0.0
  %476 = vmatprep.subr.mxu0 0.0
  %477 = vmatpush1.msra.mxu0 0.0
  %478 = vmatprep.subr.mxu0 0.0
  %479 = vmatpush1.msra.mxu0 0.0
  %480 = vmatprep.subr.mxu0 0.0
  %481 = vmatpush1.msra.mxu0 0.0
  %482 = vmatprep.subr.mxu0 0.0
  %483 = vmatpush1.msra.mxu0 0.0
  %484 = vmatprep.subr.mxu0 0.0
  %485 = vmatpush1.msra.mxu0 0.0
  %486 = vmatprep.subr.mxu0 0.0
  %487 = vmatpush1.msra.mxu0 0.0
  %488 = vmatprep.subr.mxu0 0.0
  %489 = vmatpush1.msra.mxu0 0.0
  %490 = vmatprep.subr.mxu0 0.0
  %491 = vmatpush1.msra.mxu0 0.0
  %492 = vmatprep.subr.mxu0 0.0
  %493 = vmatpush1.msra.mxu0 0.0
  %494 = vmatprep.subr.mxu0 0.0
  %495 = vmatpush1.msra.mxu0 0.0
  %496 = vmatprep.subr.mxu0 0.0
  %497 = vmatpush1.msra.mxu0 0.0
  %498 = vmatprep.subr.mxu0 0.0
  %499 = vmatpush1.msra.mxu0 0.0
  %500 = vmatprep.subr.mxu0 0.0
  %501 = vmatpush1.msra.mxu0 0.0
  %502 = vmatprep.subr.mxu0 0.0
  %503 = vmatpush1.msra.mxu0 0.0
  %504 = vmatprep.subr.mxu0 0.0
  %505 = vmatpush1.msra.mxu0 0.0
  %506 = vmatprep.subr.mxu0 0.0
  %507 = vmatpush1.msra.mxu0 0.0
  %508 = vmatprep.subr.mxu0 0.0
  %509 = vmatpush1.msra.mxu0 0.0
  %510 = vmatprep.subr.mxu0 0.0
  %511 = vmatpush1.msra.mxu0 0.0
  %512 = vmatprep.subr.mxu0 0.0
  %513 = vmatpush1.msra.mxu0 0.0
  %514 = vmatprep.subr.mxu0 0.0
  %515 = vmatpush1.msra.mxu0 0.0
  %516 = vmatprep.subr.mxu0 0.0
  %517 = vmatpush1.msra.mxu0 0.0
  %518 = vmatprep.subr.mxu0 0.0
  %519 = vmatpush1.msra.mxu0 0.0
  %520 = vmatprep.subr.mxu0 0.0
  %521 = vmatpush1.msra.mxu0 0.0
  %522 = vmatprep.mubr.f32.mxu0 0.0
  %523 = vmatmul.mubr.f32.gmra.mrb[0].mxu0 %v429
  %v524 = vpop.f32.mrb[0].mxu0
  %v525 = vadd.f32 %v426, %v524
  %v526 = vpop.f32.mrb[0].mxu0
  %527 = vmatprep.mubr.f32.mxu0 0.0
  %528 = vmatmul.mubr.f32.gmra.mrb[0].mxu0 %v432
  %v529 = vpop.f32.mrb[0].mxu0
  %v530 = vadd.f32 %v426, %v529
  %v531 = vpop.f32.mrb[0].mxu0
  %532 = vmatprep.mubr.f32.mxu0 0.0
  %533 = vmatmul.mubr.f32.gmra.mrb[0].mxu0 %v435
  %v534 = vpop.f32.mrb[0].mxu0
  %v535 = vadd.f32 %v426, %v534
  %v536 = vpop.f32.mrb[0].mxu0
  %537 = vmatprep.mubr.f32.mxu0 0.0
  %538 = vmatmul.mubr.f32.gmra.mrb[0].mxu0 %v438
  %v539 = vpop.f32.mrb[0].mxu0
  %v540 = vadd.f32 %v426, %v539
  %v541 = vpop.f32.mrb[0].mxu0
  %542 = vmatprep.mubr.f32.mxu0 0.0
  %543 = vmatmul.mubr.f32.gmra.mrb[0].mxu0 %v441
  %v544 = vpop.f32.mrb[0].mxu0
  %v545 = vadd.f32 %v426, %v544
  %v546 = vpop.f32.mrb[0].mxu0
  %547 = vmatprep.mubr.f32.mxu0 0.0
  %548 = vmatmul.mubr.f32.gmra.mrb[0].mxu0 %v444
  %v549 = vpop.f32.mrb[0].mxu0
  %v550 = vadd.f32 %v426, %v549
  %v551 = vpop.f32.mrb[0].mxu0
  %552 = vmatprep.mubr.f32.mxu0 0.0
  %553 = vmatmul.mubr.f32.gmra.mrb[0].mxu0 %v447
  %v554 = vpop.f32.mrb[0].mxu0
  %v555 = vadd.f32 %v426, %v554
  %v556 = vpop.f32.mrb[0].mxu0
  %557 = vmatprep.mubr.f32.mxu0 0.0
  %558 = vmatmul.mubr.f32.gmra.mrb[0].mxu0 %v450
  %v559 = vpop.f32.mrb[0].mxu0
  %v560 = vadd.f32 %v426, %v559
  %v561 = vpop.f32.mrb[0].mxu0
  %562 = vmatprep.mubr.f32.mxu0 0.0
  %563 = vmatmul.mubr.f32.gmra.mrb[0].mxu0 %v453
  %v564 = vpop.f32.mrb[0].mxu0
  %v565 = vadd.f32 %v426, %v564
  %v566 = vpop.f32.mrb[0].mxu0
  %567 = vmatprep.mubr.f32.mxu0 0.0
  %568 = vmatmul.mubr.f32.gmra.mrb[0].mxu0 %v456
  %v569 = vpop.f32.mrb[0].mxu0
  %v570 = vadd.f32 %v426, %v569
  %v571 = vpop.f32.mrb[0].mxu0
  %572 = vdwg.mxu0
  %v573 = vmax.f32 %v525, 0.0
  %v574 = vmax.f32 %v530, 0.0
  %v575 = vmax.f32 %v535, 0.0
  %v576 = vmax.f32 %v540, 0.0
  %v577 = vmax.f32 %v545, 0.0
  %v578 = vmax.f32 %v550, 0.0
  %v579 = vmax.f32 %v555, 0.0
  %v580 = vmax.f32 %v560, 0.0
  %v581 = vmax.f32 %v565, 0.0
  %v582 = vmax.f32 %v570, 0.0
  %v583 = vsub.f32 0.0, %v573
  %v584 = vsub.f32 0.0, %v574
  %v585 = vsub.f32 0.0, %v575
  %v586 = vsub.f32 0.0, %v576
  %v587 = vsub.f32 0.0, %v577
  %v588 = vsub.f32 0.0, %v578
  %v589 = vsub.f32 0.0, %v579
  %v590 = vsub.f32 0.0, %v580
  %v591 = vsub.f32 0.0, %v581
  %v592 = vsub.f32 0.0, %v582
  %v593 = vmul.f32 %v583, 1.442695
  %v594 = vpow.pop %v593
  %v595 = vmul.f32 %v584, 1.442695
  %v596 = vpow.pop %v595
  %v597 = vmul.f32 %v585, 1.442695
  %v598 = vpow.pop %v597
  %v599 = vmul.f32 %v586, 1.442695
  %v600 = vpow.pop %v599
  %v601 = vmul.f32 %v587, 1.442695
  %v602 = vpow.pop %v601
  %v603 = vmul.f32 %v588, 1.442695
  %v604 = vpow.pop %v603
  %v605 = vmul.f32 %v589, 1.442695
  %v606 = vpow.pop %v605
  %v607 = vmul.f32 %v590, 1.442695
  %v608 = vpow.pop %v607
  %v609 = vmul.f32 %v591, 1.442695
  %v610 = vpow.pop %v609
  %v611 = vmul.f32 %v592, 1.442695
  %v612 = vpow.pop %v611
  %v613 = vadd.f32 %v594, 1.0
  %v614 = vadd.f32 %v596, 1.0
  %v615 = vadd.f32 %v598, 1.0
  %v616 = vadd.f32 %v600, 1.0
  %v617 = vadd.f32 %v602, 1.0
  %v618 = vadd.f32 %v604, 1.0
  %v619 = vadd.f32 %v606, 1.0
  %v620 = vadd.f32 %v608, 1.0
  %v621 = vadd.f32 %v610, 1.0
  %v622 = vadd.f32 %v612, 1.0
  %v623 = vrcp.pop %v613
  %v624 = vmul.f32 1.0, %v623
  %v625 = vrcp.pop %v614
  %v626 = vmul.f32 1.0, %v625
  %v627 = vrcp.pop %v615
  %v628 = vmul.f32 1.0, %v627
  %v629 = vrcp.pop %v616
  %v630 = vmul.f32 1.0, %v629
  %v631 = vrcp.pop %v617
  %v632 = vmul.f32 1.0, %v631
  %v633 = vrcp.pop %v618
  %v634 = vmul.f32 1.0, %v633
  %v635 = vrcp.pop %v619
  %v636 = vmul.f32 1.0, %v635
  %v637 = vrcp.pop %v620
  %v638 = vmul.f32 1.0, %v637
  %v639 = vrcp.pop %v621
  %v640 = vmul.f32 1.0, %v639
  %v641 = vrcp.pop %v622
  %v642 = vmul.f32 1.0, %v641
  %v643 = vld [vmem:[%s9] sm:$0xff]
  %vm644 = vcmask 654336
  %v646 = vsel %vm644, %v643, 0
  %648 = vmatprep.subr.mxu0 0.0
  %649 = vmatpush1.msra.mxu0 %v624
  %650 = vmatprep.subr.mxu0 0.0
  %651 = vmatpush1.msra.mxu0 %v626
  %652 = vmatprep.subr.mxu0 0.0
  %653 = vmatpush1.msra.mxu0 %v628
  %654 = vmatprep.subr.mxu0 0.0
  %655 = vmatpush1.msra.mxu0 %v630
  %656 = vmatprep.subr.mxu0 0.0
  %657 = vmatpush1.msra.mxu0 %v632
  %658 = vmatprep.subr.mxu0 0.0
  %659 = vmatpush1.msra.mxu0 %v634
  %660 = vmatprep.subr.mxu0 0.0
  %661 = vmatpush1.msra.mxu0 %v636
  %662 = vmatprep.subr.mxu0 0.0
  %663 = vmatpush1.msra.mxu0 %v638
  %664 = vmatprep.subr.mxu0 0.0
  %665 = vmatpush1.msra.mxu0 %v640
  %666 = vmatprep.subr.mxu0 0.0
  %667 = vmatpush1.msra.mxu0 %v642
  %668 = vmatprep.subr.mxu0 0.0
  %669 = vmatpush1.msra.mxu0 0.0
  %670 = vmatprep.subr.mxu0 0.0
  %671 = vmatpush1.msra.mxu0 0.0
  %672 = vmatprep.subr.mxu0 0.0
  %673 = vmatpush1.msra.mxu0 0.0
  %674 = vmatprep.subr.mxu0 0.0
  %675 = vmatpush1.msra.mxu0 0.0
  %676 = vmatprep.subr.mxu0 0.0
  %677 = vmatpush1.msra.mxu0 0.0
  %678 = vmatprep.subr.mxu0 0.0
  %679 = vmatpush1.msra.mxu0 0.0
  %680 = vmatprep.subr.mxu0 0.0
  %681 = vmatpush1.msra.mxu0 0.0
  %682 = vmatprep.subr.mxu0 0.0
  %683 = vmatpush1.msra.mxu0 0.0
  %684 = vmatprep.subr.mxu0 0.0
  %685 = vmatpush1.msra.mxu0 0.0
  %686 = vmatprep.subr.mxu0 0.0
  %687 = vmatpush1.msra.mxu0 0.0
  %688 = vmatprep.subr.mxu0 0.0
  %689 = vmatpush1.msra.mxu0 0.0
  %690 = vmatprep.subr.mxu0 0.0
  %691 = vmatpush1.msra.mxu0 0.0
  %692 = vmatprep.subr.mxu0 0.0
  %693 = vmatpush1.msra.mxu0 0.0
  %694 = vmatprep.subr.mxu0 0.0
  %695 = vmatpush1.msra.mxu0 0.0
  %696 = vmatprep.subr.mxu0 0.0
  %697 = vmatpush1.msra.mxu0 0.0
  %698 = vmatprep.subr.mxu0 0.0
  %699 = vmatpush1.msra.mxu0 0.0
  %700 = vmatprep.subr.mxu0 0.0
  %701 = vmatpush1.msra.mxu0 0.0
  %702 = vmatprep.subr.mxu0 0.0
  %703 = vmatpush1.msra.mxu0 0.0
  %704 = vmatprep.subr.mxu0 0.0
  %705 = vmatpush1.msra.mxu0 0.0
  %706 = vmatprep.subr.mxu0 0.0
  %707 = vmatpush1.msra.mxu0 0.0
  %708 = vmatprep.subr.mxu0 0.0
  %709 = vmatpush1.msra.mxu0 0.0
  %710 = vmatprep.subr.mxu0 0.0
  %711 = vmatpush1.msra.mxu0 0.0
  %712 = vmatprep.mubr.f32.mxu0 0.0
  %713 = vmatmul.mubr.f32.gmra.mrb[0].mxu0 %v646
  %v714 = vpop.f32.mrb[0].mxu0
  %v715 = vadd.f32 0.0, %v714
  %v716 = vpop.f32.mrb[0].mxu0
  %717 = vdwg.mxu0
  %718 = vst [vmem:[%s10] sm:$0xff] %v715
  // Predicated region
  $region42: #{classifier_forward.3} parent=0 // pred_check
    _
  $region43: #{classifier_forward.3} parent=0 // pred_check_branch
    %720 = sbr.rel (0) target = $region45
  $region44: #{classifier_forward.3} parent=0 // pred_region
    _
  $region45: #{classifier_forward.3} parent=0 // pred_fallthru
    _
  // Predicated region
  $region46: #{classifier_forward.3} parent=0 // pred_check
    _
  $region47: #{classifier_forward.3} parent=0 // pred_check_branch
    %722 = sbr.rel (0) target = $region49
  $region48: #{classifier_forward.3} parent=0 // pred_region
    _
  $region49: #{classifier_forward.3} parent=0 // pred_fallthru
    _

</llo_original>
